<compile_context>
chip_gen: v7x
topology: tpu7x:2x2x1
jax: 0.10.0
libtpu: 0.0.40
codegen_flags: <defaults>
</compile_context>

<pallas_src>
import functools
import math
from math import gcd

import jax
import jax.numpy as jnp
from jax.experimental import pallas as pl
from jax.experimental.pallas import tpu as pltpu


_LANE = 128                         # TPU lane width
_SUBLANE = 8                        # TPU sublane width (f32)
_MXU_LANES = 256                    # MXU width on v6e/v7x; 2 passes on v5e
_MAX_GW_ELEMS = 1 * 1024 * 1024     # cap on block-diagonal gather matrix elems
_PACKED_MAX_ELEMS = 4 * 1024 * 1024  # above this, pack/unpack copies dominate


# ----------------------------------------------------------------------------
# Small helpers
# ----------------------------------------------------------------------------
def _cdiv(a, b):
    return -(-a // b)


def _round_up(a, m):
    return _cdiv(a, m) * m


def _lcm(a, b):
    return a * b // gcd(a, b)


def _vmem_budgets():
    """Returns (vmem_limit_bytes, per-step block budget, force >=2 grid steps)."""
    cap = None
    try:
        cap = int(pltpu.get_tpu_info().vmem_capacity_bytes)
    except Exception:
        cap = None
    if cap is not None and cap > 80 * 2**20:
        # 128 MiB parts (v5e / v6e, one TensorCore per chip).
        return 48 * 2**20, 16 * 2**20, False
    # 64 MiB-per-TensorCore parts (v7x, 2 TCs) or unknown: conservative budgets
    # and guarantee a >=2-step parallel grid axis so both cores get work.
    return 40 * 2**20, 8 * 2**20, True


def _block_spec(block_shape, index_map, *, single_buffer=False):
    """BlockSpec; grid-invariant operands get one VMEM buffer when supported."""
    if single_buffer and hasattr(pl, "Buffered"):
        try:
            return pl.BlockSpec(block_shape, index_map,
                                pipeline_mode=pl.Buffered(1))
        except TypeError:  # older JAX without pipeline_mode
            pass
    return pl.BlockSpec(block_shape, index_map)


def _run_with_fallback(run):
    """Run with single-buffered constants; retry with defaults if rejected."""
    try:
        return run(True)
    except Exception:
        return run(False)


# ----------------------------------------------------------------------------
# Nearest-exact source index (PyTorch semantics):
#   src = clamp(floor((dst + 0.5) * in / out), 0, in - 1)
# ----------------------------------------------------------------------------
def _nearest_exact_src_idx(in_size: int, out_size: int) -> jnp.ndarray:
    dst = jnp.arange(out_size, dtype=jnp.float32)
    src = jnp.floor((dst + 0.5) * (float(in_size) / float(out_size)))
    return jnp.clip(src, 0.0, float(in_size - 1)).astype(jnp.int32)


def _one_hot(idx: jnp.ndarray, depth: int, dtype) -> jnp.ndarray:
    return (idx[:, None] == jnp.arange(depth, dtype=jnp.int32)[None, :]).astype(dtype)


def _resolve_out_size(in_size, size, scale_factor, axis):
    if size is not None:
        if isinstance(size, (tuple, list)):
            return int(size[axis])
        return int(size)
    sf = scale_factor
    if isinstance(sf, (tuple, list)):
        sf = sf[axis]
    return int(math.floor(in_size * float(sf)))


# ----------------------------------------------------------------------------
# Kernels
# ----------------------------------------------------------------------------
def _gather_matmul_kernel(x_ref, gh_ref, gw_ref, o_ref, *, gh_first):
    """out = Gh @ x @ Gw for one lane-packed slab."""
    x = x_ref[...]
    gh = gh_ref[...]
    gw = gw_ref[...]
    if gh_first:
        tmp = jnp.dot(gh, x, preferred_element_type=jnp.float32).astype(x.dtype)
        out = jnp.dot(tmp, gw, preferred_element_type=jnp.float32)
    else:
        tmp = jnp.dot(x, gw, preferred_element_type=jnp.float32).astype(x.dtype)
        out = jnp.dot(gh, tmp, preferred_element_type=jnp.float32)
    o_ref[...] = out.astype(o_ref.dtype)


def _batched_image_kernel(x_ref, gh_ref, gw_ref, o_ref, *, gh_first, nb):
    """NB independent images per grid step (amortizes grid-step overhead)."""
    gh = gh_ref[...]   # (TH, H_in)
    gw = gw_ref[...]   # (W_in, W_out_pad)
    for b in range(nb):            # static unroll; each iter = two MXU matmuls
        xb = x_ref[b]              # (H_in, W_in)
        if gh_first:
            tmp = jnp.dot(gh, xb, preferred_element_type=jnp.float32).astype(xb.dtype)
            out = jnp.dot(tmp, gw, preferred_element_type=jnp.float32)
        else:
            tmp = jnp.dot(xb, gw, preferred_element_type=jnp.float32).astype(xb.dtype)
            out = jnp.dot(gh, tmp, preferred_element_type=jnp.float32)
        o_ref[b] = out.astype(o_ref.dtype)


# ----------------------------------------------------------------------------
# Path 1: lane-packed batched kernel (narrow outputs, small tensors).
# ----------------------------------------------------------------------------
def _plan_packed(B, H_in, W_in, H_out, W_out, itemsize, block_budget,
                 force_two_steps):
    """Tile plan for the lane-packed path, or None if it does not fit."""
    # Smallest image-block so both packed lane widths are multiples of 128.
    c0 = _lcm(_LANE // gcd(W_in, _LANE), _LANE // gcd(W_out, _LANE))
    if c0 * c0 * W_in * W_out > _MAX_GW_ELEMS:
        return None
    wmax = max(W_in, W_out)
    c_blk = c0
    # Grow packing but stop at the MXU width: the block-diagonal matmul does
    # dense lane_in x lane_out work, so wasted FLOPs scale with C_BLK.  Only
    # exceed it while the grid would stay strongly step-overhead-bound.
    while (c_blk * 2 <= B
           and (c_blk * 2) ** 2 * W_in * W_out <= _MAX_GW_ELEMS
           and ((c_blk * 2) * wmax <= _MXU_LANES
                or ((c_blk * 2) * wmax <= 2 * _MXU_LANES
                    and B // (c_blk * 2) >= 32))):
        c_blk *= 2
    b_pad = _round_up(B, c_blk)          # tiny batches pad up to the block so
    num_b = b_pad // c_blk               # lane_out stays a multiple of 128
    lane_in, lane_out = c_blk * W_in, c_blk * W_out

    # Largest H_out tile inside the per-step VMEM budget
    # (x, gh, out double-buffered; gw_blk single-buffered).
    elems = block_budget // itemsize
    avail = elems - 2 * H_in * lane_in - lane_in * lane_out
    if avail <= 0:
        return None
    th_cap = (avail // (2 * (H_in + lane_out))) // _SUBLANE * _SUBLANE
    if th_cap < _SUBLANE:
        return None
    th_cap = min(th_cap, 512)

    h8 = _round_up(H_out, _SUBLANE)
    min_h = 2 if (force_two_steps and num_b == 1 and h8 >= 2 * _SUBLANE) else 1
    num_h = max(_cdiv(h8, th_cap), min_h)
    th = _round_up(_cdiv(h8, num_h), _SUBLANE)
    h_out_pad = th * num_h
    return dict(c_blk=c_blk, b_pad=b_pad, num_b=num_b,
                th=th, num_h=num_h, h_out_pad=h_out_pad)


def _interp_packed(x_flat, gh, gw, B, H_in, W_in, H_out, W_out, cdtype, plan,
                   vmem_limit):
    itemsize = jnp.dtype(cdtype).itemsize
    c_blk, b_pad, num_b = plan["c_blk"], plan["b_pad"], plan["num_b"]
    th, num_h, h_out_pad = plan["th"], plan["num_h"], plan["h_out_pad"]

    if b_pad > B:
        x_flat = jnp.concatenate(
            [x_flat, jnp.zeros((b_pad - B, H_in, W_in), cdtype)], axis=0)
    if h_out_pad > H_out:
        gh = jnp.concatenate(
            [gh, jnp.zeros((h_out_pad - H_out, H_in), cdtype)], axis=0)

    # Pack images along the lane axis: (H_in, b_pad * W_in).
    # TODO(synk): this pack and the matching unpack below are extra HBM round
    # trips; large tensors are routed to the batched path instead (wrapper).
    x_packed = jnp.transpose(x_flat, (1, 0, 2)).reshape(H_in, b_pad * W_in)
    gw_blk = jnp.kron(jnp.eye(c_blk, dtype=cdtype), gw)  # block-diag col gather
    lane_in, lane_out = c_blk * W_in, c_blk * W_out

    gh_first = (th * H_in * lane_in + th * lane_in * lane_out) <= (
        H_in * lane_in * lane_out + th * H_in * lane_out)
    kernel = functools.partial(_gather_matmul_kernel, gh_first=gh_first)

    # Cost estimate reflects the dense block-diagonal work actually executed;
    # the grid-invariant gw_blk is counted once.
    if gh_first:
        step_flops = 2 * (th * H_in * lane_in + th * lane_in * lane_out)
    else:
        step_flops = 2 * (H_in * lane_in * lane_out + th * H_in * lane_out)
    flops = step_flops * num_b * num_h
    bytes_accessed = (x_packed.size + gh.size * num_b + gw_blk.size
                      + h_out_pad * b_pad * W_out) * itemsize

    def run(single_buffer):
        return pl.pallas_call(
            kernel,
            out_shape=jax.ShapeDtypeStruct((h_out_pad, b_pad * W_out), cdtype),
            grid_spec=pltpu.PrefetchScalarGridSpec(
                num_scalar_prefetch=0,
                grid=(num_b, num_h),   # h innermost -> x block reused across h
                in_specs=[
                    pl.BlockSpec((H_in, lane_in), lambda b, h: (0, b)),
                    pl.BlockSpec((th, H_in), lambda b, h: (h, 0)),
                    _block_spec((lane_in, lane_out), lambda b, h: (0, 0),
                                single_buffer=single_buffer),
                ],
                out_specs=pl.BlockSpec((th, lane_out), lambda b, h: (h, b)),
            ),
            compiler_params=pltpu.CompilerParams(
                dimension_semantics=("parallel", "parallel"),
                vmem_limit_bytes=vmem_limit),
            cost_estimate=pl.CostEstimate(
                flops=int(flops), transcendentals=0,
                bytes_accessed=int(bytes_accessed)),
        )(x_packed, gh, gw_blk)

    out_packed = _run_with_fallback(run)
    out = out_packed.reshape(h_out_pad, b_pad, W_out)
    return jnp.transpose(out, (1, 0, 2))[:B, :H_out]   # (B, H_out, W_out)


# ----------------------------------------------------------------------------
# Path 2: batched per-image kernel (wide outputs / large tensors / fallback).
# ----------------------------------------------------------------------------
def _interp_batched(x_flat, gh, gw, B, H_in, W_in, H_out, W_out, cdtype,
                    block_budget, vmem_limit, force_two_steps):
    itemsize = jnp.dtype(cdtype).itemsize
    elems = block_budget // itemsize

    # Lane-dense stores: pad W_out up to a multiple of 128 when it is already
    # >= 128 (relative padding <= 2x).  Narrow outputs keep their exact width
    # (full-extent last dim; masked stores) to avoid >2x write amplification.
    if W_out >= _LANE and W_out % _LANE != 0:
        w_out_pad = _round_up(W_out, _LANE)
    else:
        w_out_pad = W_out
    if w_out_pad > W_out:
        gw = jnp.concatenate(
            [gw, jnp.zeros((W_in, w_out_pad - W_out), cdtype)], axis=1)

    # H_out tiling keeps gh / out blocks inside the per-step VMEM budget
    # (important on v7x's 64 MiB per TensorCore).
    # TODO(synk): images whose single (H_in, W_in) slab exceeds the VMEM budget
    # would additionally need input H/W tiling; not needed for the feature-map
    # sizes this module is used with.
    avail_th = elems - 2 * H_in * W_in - W_in * w_out_pad
    if avail_th > 0:
        th_cap = max((avail_th // (2 * (H_in + w_out_pad)))
                     // _SUBLANE * _SUBLANE, _SUBLANE)
    else:
        th_cap = _SUBLANE
    th_cap = min(th_cap, 512)
    h8 = _round_up(H_out, _SUBLANE)
    num_h = max(_cdiv(h8, th_cap), 1)
    th = _round_up(_cdiv(h8, num_h), _SUBLANE)

    # Images per grid step: amortize the ~600-cycle grid-step overhead.
    per_img = 2 * (H_in * W_in + th * w_out_pad)
    avail_nb = elems - 2 * th * H_in - W_in * w_out_pad
    nb = 1
    if avail_nb > 0:
        nb = int(max(1, min(B, 8, avail_nb // per_img)))
    num_bsteps = _cdiv(B, nb)

    # Keep both v7x TensorCores busy: guarantee >=2 steps on a parallel axis.
    if force_two_steps and num_bsteps * num_h == 1:
        if nb >= 2:
            nb = _cdiv(nb, 2)
            num_bsteps = _cdiv(B, nb)
        elif h8 >= 2 * _SUBLANE:
            num_h = 2
            th = _round_up(_cdiv(h8, num_h), _SUBLANE)

    h_out_pad = th * num_h
    if h_out_pad > H_out:
        gh = jnp.concatenate(
            [gh, jnp.zeros((h_out_pad - H_out, H_in), cdtype)], axis=0)
    b_pad = nb * num_bsteps
    if b_pad > B:
        x_flat = jnp.concatenate(
            [x_flat, jnp.zeros((b_pad - B, H_in, W_in), cdtype)], axis=0)

    # Cheaper contraction order (per image, padded sizes).
    gh_first = (th * H_in * W_in + th * W_in * w_out_pad) <= (
        H_in * W_in * w_out_pad + th * H_in * w_out_pad)
    kernel = functools.partial(_batched_image_kernel, gh_first=gh_first, nb=nb)

    if gh_first:
        per_img_flops = 2 * (th * H_in * W_in + th * W_in * w_out_pad)
    else:
        per_img_flops = 2 * (H_in * W_in * w_out_pad + th * H_in * w_out_pad)
    flops = per_img_flops * nb * num_bsteps * num_h
    bytes_accessed = (b_pad * H_in * W_in                 # x, read once
                      + th * H_in * num_bsteps * num_h    # gh tiles
                      + W_in * w_out_pad                  # gw, grid-invariant
                      + b_pad * h_out_pad * w_out_pad) * itemsize

    def run(single_buffer):
        return pl.pallas_call(
            kernel,
            out_shape=jax.ShapeDtypeStruct((b_pad, h_out_pad, w_out_pad), cdtype),
            grid_spec=pltpu.PrefetchScalarGridSpec(
                num_scalar_prefetch=0,
                grid=(num_bsteps, num_h),  # h innermost -> x block reused
                in_specs=[
                    pl.BlockSpec((nb, H_in, W_in), lambda i, h: (i, 0, 0)),
                    pl.BlockSpec((th, H_in), lambda i, h: (h, 0)),
                    _block_spec((W_in, w_out_pad), lambda i, h: (0, 0),
                                single_buffer=single_buffer),
                ],
                out_specs=pl.BlockSpec((nb, th, w_out_pad),
                                       lambda i, h: (i, h, 0)),
            ),
            compiler_params=pltpu.CompilerParams(
                dimension_semantics=("parallel", "parallel"),
                vmem_limit_bytes=vmem_limit),
            cost_estimate=pl.CostEstimate(
                flops=int(flops), transcendentals=0,
                bytes_accessed=int(bytes_accessed)),
        )(x_flat, gh, gw)

    out = _run_with_fallback(run)
    return out[:B, :H_out, :W_out]


# ----------------------------------------------------------------------------
# Wrapper mirroring Interpolate.forward for 4D NCHW input, mode='nearest-exact'.
# ----------------------------------------------------------------------------
def interpolate_nearest_exact(x, size=None, scale_factor=None):
    # TODO(synk): only mode='nearest-exact' on 4D NCHW input is implemented
    # (the module's default); linear/bilinear/bicubic/area modes not ported.
    assert x.ndim == 4, "expected NCHW input"
    N, C, H_in, W_in = map(int, x.shape)
    H_out = _resolve_out_size(H_in, size, scale_factor, 0)
    W_out = _resolve_out_size(W_in, size, scale_factor, 1)
    B = N * C

    orig_dtype = x.dtype
    if x.dtype == jnp.float32 or x.dtype == jnp.bfloat16:
        cdtype = x.dtype          # bf16 feeds the MXU natively; no upcast
    else:
        # TODO(synk): non-float inputs take an f32 round trip (exact for |x|<2**24).
        cdtype = jnp.float32
    xc = x.astype(cdtype)
    itemsize = jnp.dtype(cdtype).itemsize

    vmem_limit, block_budget, force_two_steps = _vmem_budgets()

    src_h = _nearest_exact_src_idx(H_in, H_out)
    src_w = _nearest_exact_src_idx(W_in, W_out)
    gh = _one_hot(src_h, H_in, cdtype)        # (H_out, H_in) row gather
    gw = _one_hot(src_w, W_in, cdtype).T      # (W_in, W_out) column gather

    x_flat = xc.reshape(B, H_in, W_in)

    # Lane-packed path only for narrow outputs on small tensors: for large
    # tensors its wrapper-side pack/unpack transposes (~2x HBM traffic on a
    # memory-bound op) outweigh the lane-density win.
    plan = None
    total_elems = B * (H_in * W_in + H_out * W_out)
    if W_out < _LANE and total_elems <= _PACKED_MAX_ELEMS:
        plan = _plan_packed(B, H_in, W_in, H_out, W_out, itemsize,
                            block_budget, force_two_steps)

    if plan is not None:
        out_flat = _interp_packed(x_flat, gh, gw, B, H_in, W_in, H_out, W_out,
                                  cdtype, plan, vmem_limit)
    else:
        out_flat = _interp_batched(x_flat, gh, gw, B, H_in, W_in, H_out, W_out,
                                   cdtype, block_budget, vmem_limit,
                                   force_two_steps)

    return out_flat.reshape(N, C, H_out, W_out).astype(orig_dtype)


# Pure-JAX reference (same nearest-exact formula) for correctness checking.
def _reference(x, size=None, scale_factor=None):
    N, C, H_in, W_in = x.shape
    H_out = _resolve_out_size(H_in, size, scale_factor, 0)
    W_out = _resolve_out_size(W_in, size, scale_factor, 1)
    src_h = _nearest_exact_src_idx(H_in, H_out)
    src_w = _nearest_exact_src_idx(W_in, W_out)
    return x[:, :, src_h, :][:, :, :, src_w]


if __name__ == "__main__":
    key = jax.random.PRNGKey(0)
    x = jax.random.normal(key, (2, 4, 16, 16), dtype=jnp.float32)

    # Interpolate(scale_factor=2, mode='nearest-exact') -> lane-packed path.
    out = jax.block_until_ready(interpolate_nearest_exact(x, scale_factor=2))
    ref = _reference(x, scale_factor=2)
    assert out.shape == (2, 4, 32, 32), out.shape
    assert jnp.allclose(out, ref), "mismatch vs reference (scale_factor=2)"

    # size= path, non-integer ratio (16 -> 24); batch padded to alignment block.
    out2 = jax.block_until_ready(interpolate_nearest_exact(x, size=(24, 24)))
    ref2 = _reference(x, size=(24, 24))
    assert out2.shape == (2, 4, 24, 24), out2.shape
    assert jnp.allclose(out2, ref2), "mismatch vs reference (size path)"

    # Tall output exercises the H_out tiling branch of the packed path.
    x3 = jax.random.normal(jax.random.PRNGKey(1), (1, 2, 16, 16), dtype=jnp.float32)
    out3 = jax.block_until_ready(interpolate_nearest_exact(x3, scale_factor=(40, 2)))
    ref3 = _reference(x3, scale_factor=(40, 2))
    assert out3.shape == (1, 2, 640, 32), out3.shape
    assert jnp.allclose(out3, ref3), "mismatch vs reference (H tiling path)"

    # Wide output (W_out >= 128) exercises the batched-image path.
    x4 = jax.random.normal(jax.random.PRNGKey(2), (1, 2, 8, 64), dtype=jnp.float32)
    out4 = jax.block_until_ready(interpolate_nearest_exact(x4, scale_factor=2))
    ref4 = _reference(x4, scale_factor=2)
    assert out4.shape == (1, 2, 16, 128), out4.shape
    assert jnp.allclose(out4, ref4), "mismatch vs reference (batched path)"

    # W_out = 144: batched path with lane padding to 256 + wrapper slice back.
    x5 = jax.random.normal(jax.random.PRNGKey(3), (1, 2, 8, 72), dtype=jnp.float32)
    out5 = jax.block_until_ready(interpolate_nearest_exact(x5, scale_factor=2))
    ref5 = _reference(x5, scale_factor=2)
    assert out5.shape == (1, 2, 16, 144), out5.shape
    assert jnp.allclose(out5, ref5), "mismatch vs reference (lane-padded path)"

    # bf16 stays bf16 end-to-end (no f32 upcast); gather is exact.
    xb = x.astype(jnp.bfloat16)
    outb = jax.block_until_ready(interpolate_nearest_exact(xb, scale_factor=2))
    refb = _reference(xb, scale_factor=2)
    assert outb.dtype == jnp.bfloat16, outb.dtype
    assert jnp.allclose(outb, refb), "mismatch vs reference (bf16 path)"

    print("KERNEL_OK")
</pallas_src>

<mosaic_0001>
module attributes {stable_mosaic.version = 11 : i64} {
  func.func @_gather_matmul_kernel(%arg0: i32, %arg1: i32, %arg2: memref<16x128xf32, #tpu.memory_space<vmem>>, %arg3: memref<16x16xf32, #tpu.memory_space<vmem>>, %arg4: memref<128x256xf32, #tpu.memory_space<vmem>>, %arg5: memref<16x256xf32, #tpu.memory_space<vmem>>) attributes {dimension_semantics = [#tpu.dimension_semantics<parallel>, #tpu.dimension_semantics<parallel>], iteration_bounds = array<i64: 1, 2>, scalar_prefetch = 0 : i64, scratch_operands = 0 : i64, tpu.core_type = #tpu.core_type<tc>, window_params = [{transform_indices = @transform_0, window_bounds = array<i64: 16, 128>}, {transform_indices = @transform_1, window_bounds = array<i64: 16, 16>}, {pipeline_mode = #tpu.pipeline_mode<synchronous>, transform_indices = @transform_2, window_bounds = array<i64: 128, 256>}, {transform_indices = @transform_3, window_bounds = array<i64: 16, 256>}]} {
    %c0 = arith.constant 0 : index
    %c0_0 = arith.constant 0 : index
    %0 = vector.load %arg2[%c0, %c0_0] : memref<16x128xf32, #tpu.memory_space<vmem>>, vector<16x128xf32>
    %c0_1 = arith.constant 0 : index
    %c0_2 = arith.constant 0 : index
    %1 = vector.load %arg3[%c0_1, %c0_2] : memref<16x16xf32, #tpu.memory_space<vmem>>, vector<16x16xf32>
    %c0_3 = arith.constant 0 : index
    %c0_4 = arith.constant 0 : index
    %2 = vector.load %arg4[%c0_3, %c0_4] : memref<128x256xf32, #tpu.memory_space<vmem>>, vector<128x256xf32>
    %cst = arith.constant dense<0.000000e+00> : vector<16x128xf32>
    %3 = tpu.matmul %1, %0, %cst {dimension_numbers = #tpu.dot_dimension_numbers<[1], [0], [0], [1], [0, 0, 1, 1], [], []>} : vector<16x16xf32>, vector<16x128xf32>, vector<16x128xf32> -> vector<16x128xf32>
    %cst_5 = arith.constant dense<0.000000e+00> : vector<16x256xf32>
    %4 = tpu.matmul %3, %2, %cst_5 {dimension_numbers = #tpu.dot_dimension_numbers<[1], [0], [0], [1], [0, 0, 1, 1], [], []>} : vector<16x128xf32>, vector<128x256xf32>, vector<16x256xf32> -> vector<16x256xf32>
    %c0_6 = arith.constant 0 : index
    %c0_7 = arith.constant 0 : index
    %5 = vector.load %arg5[%c0_6, %c0_7] : memref<16x256xf32, #tpu.memory_space<vmem>>, vector<16x256xf32>
    tpu.vector_store %arg5[%c0_6, %c0_7], %4 {strides = array<i32>} : memref<16x256xf32, #tpu.memory_space<vmem>>, vector<16x256xf32>,
    return
  }
  func.func @transform_0(%arg0: i32, %arg1: i32) -> (i32, i32) {
    %c0_i32 = arith.constant 0 : i32
    %c0_i32_0 = arith.constant 0 : i32
    return %c0_i32, %arg0 : i32, i32
  }
  func.func @transform_1(%arg0: i32, %arg1: i32) -> (i32, i32) {
    %c0_i32 = arith.constant 0 : i32
    %c0_i32_0 = arith.constant 0 : i32
    return %arg1, %c0_i32 : i32, i32
  }
  func.func @transform_2(%arg0: i32, %arg1: i32) -> (i32, i32) {
    %c0_i32 = arith.constant 0 : i32
    %c0_i32_0 = arith.constant 0 : i32
    %c0_i32_1 = arith.constant 0 : i32
    return %c0_i32, %c0_i32_0 : i32, i32
  }
  func.func @transform_3(%arg0: i32, %arg1: i32) -> (i32, i32) {
    %c0_i32 = arith.constant 0 : i32
    return %arg1, %arg0 : i32, i32
  }
}

module attributes {stable_mosaic.version = 11 : i64} {
  func.func @_gather_matmul_kernel(%arg0: i32, %arg1: i32, %arg2: memref<16x128xf32, #tpu.memory_space<vmem>>, %arg3: memref<16x16xf32, #tpu.memory_space<vmem>>, %arg4: memref<128x256xf32, #tpu.memory_space<vmem>>, %arg5: memref<16x256xf32, #tpu.memory_space<vmem>>) attributes {dimension_semantics = [#tpu.dimension_semantics<parallel>, #tpu.dimension_semantics<parallel>], iteration_bounds = array<i64: 1, 2>, scalar_prefetch = 0 : i64, scratch_operands = 0 : i64, tpu.core_type = #tpu.core_type<tc>, window_params = [{transform_indices = @transform_0, window_bounds = array<i64: 16, 128>}, {transform_indices = @transform_1, window_bounds = array<i64: 16, 16>}, {pipeline_mode = #tpu.pipeline_mode<synchronous>, transform_indices = @transform_2, window_bounds = array<i64: 128, 256>}, {transform_indices = @transform_3, window_bounds = array<i64: 16, 256>}]} {
    %c0 = arith.constant 0 : index
    %c0_0 = arith.constant 0 : index
    %0 = vector.load %arg2[%c0, %c0_0] : memref<16x128xf32, #tpu.memory_space<vmem>>, vector<16x128xf32>
    %c0_1 = arith.constant 0 : index
    %c0_2 = arith.constant 0 : index
    %1 = vector.load %arg3[%c0_1, %c0_2] : memref<16x16xf32, #tpu.memory_space<vmem>>, vector<16x16xf32>
    %c0_3 = arith.constant 0 : index
    %c0_4 = arith.constant 0 : index
    %2 = vector.load %arg4[%c0_3, %c0_4] : memref<128x256xf32, #tpu.memory_space<vmem>>, vector<128x256xf32>
    %cst = arith.constant dense<0.000000e+00> : vector<16x128xf32>
    %3 = tpu.matmul %1, %0, %cst {dimension_numbers = #tpu.dot_dimension_numbers<[1], [0], [0], [1], [0, 0, 1, 1], [], []>} : vector<16x16xf32>, vector<16x128xf32>, vector<16x128xf32> -> vector<16x128xf32>
    %cst_5 = arith.constant dense<0.000000e+00> : vector<16x256xf32>
    %4 = tpu.matmul %3, %2, %cst_5 {dimension_numbers = #tpu.dot_dimension_numbers<[1], [0], [0], [1], [0, 0, 1, 1], [], []>} : vector<16x128xf32>, vector<128x256xf32>, vector<16x256xf32> -> vector<16x256xf32>
    %c0_6 = arith.constant 0 : index
    %c0_7 = arith.constant 0 : index
    %5 = vector.load %arg5[%c0_6, %c0_7] : memref<16x256xf32, #tpu.memory_space<vmem>>, vector<16x256xf32>
    tpu.vector_store %arg5[%c0_6, %c0_7], %4 {strides = array<i32>} : memref<16x256xf32, #tpu.memory_space<vmem>>, vector<16x256xf32>,
    return
  }
  func.func @transform_0(%arg0: i32, %arg1: i32) -> (i32, i32) {
    %c0_i32 = arith.constant 0 : i32
    %c0_i32_0 = arith.constant 0 : i32
    return %c0_i32, %arg0 : i32, i32
  }
  func.func @transform_1(%arg0: i32, %arg1: i32) -> (i32, i32) {
    %c0_i32 = arith.constant 0 : i32
    %c0_i32_0 = arith.constant 0 : i32
    return %arg1, %c0_i32 : i32, i32
  }
  func.func @transform_2(%arg0: i32, %arg1: i32) -> (i32, i32) {
    %c0_i32 = arith.constant 0 : i32
    %c0_i32_0 = arith.constant 0 : i32
    %c0_i32_1 = arith.constant 0 : i32
    return %c0_i32, %c0_i32_0 : i32, i32
  }
  func.func @transform_3(%arg0: i32, %arg1: i32) -> (i32, i32) {
    %c0_i32 = arith.constant 0 : i32
    return %arg1, %arg0 : i32, i32
  }
}

</mosaic_0001>

<llo_original>
// kernel: tpu_custom_call.1
$region0: #{tpu_custom_call.1}
  #allocation0 [shape = 'u32[]', space=smem, size = 0x4, offset = 0x4, fixed_abs, tag = 'smem constant byte address 0x4 - core index']
  #allocation1 [shape = 'u32[144,128]{1,0:T(1,128)}', space=vmem, size = 0x12000, scoped, tag = 'internal scratch']
  %s0 = inlined_call_operand.vmem [shape: f32[16,128], index: 0, kind: input, shape index: {}]
  %s1 = inlined_call_operand.vmem [shape: f32[32,16], index: 1, kind: input, shape index: {}]
  %s2 = inlined_call_operand.hbm [shape: f32[128,256], index: 2, kind: input, shape index: {}]
  %s3 = inlined_call_operand.hbm [shape: f32[32,256], index: 3, kind: output, shape index: {}]
  %s4 = sld [smem:[#allocation0]]
  $region49: #{tpu_custom_call.1} parent=0
    _
  %s6 = ssub.s32 1, %s4
  %s7 = scalar_select 0, %s6, %s4
  $region1: #{tpu_custom_call.1} parent=0
    #allocation2 [shape = 'u8[131072]{0}', space=vmem, size = 0x20000, scoped, tag = 'input window, operand 2, single buffered']
    #allocation3 [shape = 's32[2]{0}', space=sflag, size = 0x8, scoped, tag = 'scoped memory for tpu_custom_call.1']
    #allocation4 [shape = 's32[2]{0}', space=sflag, size = 0x8, scoped, tag = 'scoped memory for tpu_custom_call.1']
    #allocation5 [shape = 'u8[32768]{0}', space=vmem, size = 0x8000, scoped, tag = 'output window, operand 0']
    %8 = vsyncpa [#allocation3], 0
    %9 = vsyncpa [#allocation4], 0
    %s10 = scalar_lea.sflag [#allocation4], 1
    %11 = vsyncpa %s10, 0
    loop: start=0, step=1, limit=4
    $region2: #{tpu_custom_call.1} parent=1 // loop_pre_header
      _
    $region3: #{tpu_custom_call.1} parent=1 // loop_header
      %s13 = sphi 0, %s17
      %p14 = scmp.ge.s32.totalorder %s13, 4
      %s20 = sphi 0, %s32
      %s21 = sphi 0, %s28
      %s22 = sphi 0, %s20
      %s23 = sphi 0, %s21
      %s24 = sphi 0, %s22
      %s25 = sphi 0, %s23
      %s35 = sphi 0, %s37
      %s38 = sphi 0, %s35
      %s39 = sphi 0, %s38
      %s55 = sphi 0, %s39
      %s61 = sphi 0, %s63
      %s64 = sphi 0, %s61
      %s65 = sphi 0, %s64
      %s81 = sphi 0, %s65
      %s85 = sphi 0, %s85
      %s87 = sphi 0, %s85
      %s88 = sphi 0, %s87
      %s102 = sphi 0, %s88
      %s110 = sphi 0, %s112
      %s113 = sphi 0, %s110
      %s114 = sphi 0, %s113
      %s130 = sphi 0, %s114
    $region4: #{tpu_custom_call.1} parent=1 // loop_header_branch
      %16 = sbr.rel (%p14) target = $region8
    $region5: #{tpu_custom_call.1} parent=1 // loop_body
      %s18 = ssub.s32 %s13, 1
      %s19 = ssub.s32 %s13, 2
      %s26 = sadd.s32 1, %s21
      %p27 = scmp.ge.s32.totalorder %s26, 2
      %s28 = scalar_select %p27, 0, %s26
      %s29 = sadd.s32 1, %s20
      %s30 = scalar_select %p27, %s29, %s20
      %p31 = scmp.ge.s32.totalorder %s30, 1
      %s32 = scalar_select %p31, 0, %s30
      %s33 = ssub.s32 %s20, %s32
      %p34 = scmp.eq.s32.totalorder %s33, 0
      %s36 = sadd.s32 %s35, 1
      %s37 = scalar_select %p34, %s35, %s36
      %p40 = pneg %p34
      %p41 = scmp.eq.s32.totalorder %s13, 1
      %p42 = por %p40, %p41
      %p43 = scmp.ne.s32.totalorder %s35, %s38
      %p44 = scmp.eq.s32.totalorder %s13, 0
      %p45 = por %p43, %p44
      %p46 = scmp.ne.s32.totalorder %s35, %s38
      %p47 = scmp.eq.s32.totalorder %s18, 1
      %p48 = por %p46, %p47
      %p49 = scmp.ne.s32.totalorder %s38, %s39
      %p50 = scmp.eq.s32.totalorder %s18, 0
      %p51 = por %p49, %p50
      %p52 = scmp.ne.s32.totalorder %s38, %s39
      %p53 = scmp.eq.s32.totalorder %s19, 1
      %p54 = por %p52, %p53
      %p56 = scmp.ne.s32.totalorder %s39, %s55
      %p57 = scmp.eq.s32.totalorder %s19, 0
      %p58 = por %p56, %p57
      %s59 = ssub.s32 %s21, %s28
      %p60 = scmp.eq.s32.totalorder %s59, 0
      %s62 = sadd.s32 %s61, 1
      %s63 = scalar_select %p60, %s61, %s62
      %p66 = pneg %p60
      %p67 = scmp.eq.s32.totalorder %s13, 1
      %p68 = por %p66, %p67
      %p69 = scmp.ne.s32.totalorder %s61, %s64
      %p70 = scmp.eq.s32.totalorder %s13, 0
      %p71 = por %p69, %p70
      %p72 = scmp.ne.s32.totalorder %s61, %s64
      %p73 = scmp.eq.s32.totalorder %s18, 1
      %p74 = por %p72, %p73
      %p75 = scmp.ne.s32.totalorder %s64, %s65
      %p76 = scmp.eq.s32.totalorder %s18, 0
      %p77 = por %p75, %p76
      %p78 = scmp.ne.s32.totalorder %s64, %s65
      %p79 = scmp.eq.s32.totalorder %s19, 1
      %p80 = por %p78, %p79
      %p82 = scmp.ne.s32.totalorder %s65, %s81
      %p83 = scmp.eq.s32.totalorder %s19, 0
      %p84 = por %p82, %p83
      %s86 = sadd.s32 %s85, 1
      %p89 = scmp.eq.s32.totalorder %s13, 1
      %p90 = scmp.ne.s32.totalorder %s85, %s87
      %p91 = scmp.eq.s32.totalorder %s13, 0
      %p92 = por %p90, %p91
      %p93 = scmp.ne.s32.totalorder %s85, %s87
      %p94 = scmp.eq.s32.totalorder %s18, 1
      %p95 = por %p93, %p94
      %p96 = scmp.ne.s32.totalorder %s87, %s88
      %p97 = scmp.eq.s32.totalorder %s18, 0
      %p98 = por %p96, %p97
      %p99 = scmp.ne.s32.totalorder %s87, %s88
      %p100 = scmp.eq.s32.totalorder %s19, 1
      %p101 = por %p99, %p100
      %p103 = scmp.ne.s32.totalorder %s88, %s102
      %p104 = scmp.eq.s32.totalorder %s19, 0
      %p105 = por %p103, %p104
      %s106 = ssub.s32 %s21, %s28
      %s107 = ssub.s32 %s20, %s32
      %s108 = sor.u32 %s106, %s107
      %p109 = scmp.eq.s32.totalorder %s108, 0
      %s111 = sadd.s32 %s110, 1
      %s112 = scalar_select %p109, %s110, %s111
      %p115 = pneg %p109
      %p116 = scmp.eq.s32.totalorder %s13, 1
      %p117 = por %p115, %p116
      %p118 = scmp.ne.s32.totalorder %s110, %s113
      %p119 = scmp.eq.s32.totalorder %s13, 0
      %p120 = por %p118, %p119
      %p121 = scmp.ne.s32.totalorder %s110, %s113
      %p122 = scmp.eq.s32.totalorder %s18, 1
      %p123 = por %p121, %p122
      %p124 = scmp.ne.s32.totalorder %s113, %s114
      %p125 = scmp.eq.s32.totalorder %s18, 0
      %p126 = por %p124, %p125
      %p127 = scmp.ne.s32.totalorder %s113, %s114
      %p128 = scmp.eq.s32.totalorder %s19, 1
      %p129 = por %p127, %p128
      %p131 = scmp.ne.s32.totalorder %s114, %s130
      %p132 = scmp.eq.s32.totalorder %s19, 0
      %p133 = por %p131, %p132
      %p134 = scmp.le.s32.totalorder 1, %s13
      %p135 = scmp.lt.s32.totalorder %s13, 3
      %p136 = pnand %p134, %p135
      %p137 = pneg %p136
      // Predicated region
      $region9: #{tpu_custom_call.1} parent=5 // pred_check
        _
      $region10: #{tpu_custom_call.1} parent=5 // pred_check_branch
        %139 = sbr.rel (%p136) target = $region12
      $region11: #{tpu_custom_call.1} parent=5 // pred_region
        %s140 = ssub.s32 %s13, 1
        // Predicated region
        $region13: #{tpu_custom_call.1} parent=11 // pred_check
          %p141 = pneg %p51
        $region14: #{tpu_custom_call.1} parent=11 // pred_check_branch
          %143 = sbr.rel (%p141) target = $region16
        $region15: #{tpu_custom_call.1} parent=11 // pred_region
          %p144 = scmp.lt.s32.totalorder %s22, 0
          %s145 = scalar_select %p144, %s22, 0
          %s146 = smul.addr %s145, 8
          %s147 = scalar_lea.vmem %s0, %s146
        $region16: #{tpu_custom_call.1} parent=11 // pred_fallthru
          _
        // Predicated region
        $region17: #{tpu_custom_call.1} parent=11 // pred_check
          %p148 = pneg %p98
        $region18: #{tpu_custom_call.1} parent=11 // pred_check_branch
          %150 = sbr.rel (%p148) target = $region20
        $region19: #{tpu_custom_call.1} parent=11 // pred_region
          %s152 = ssub.s32 4096, 4096
          %153 = vsyncadd [#allocation3], %s152
          %s154 = sshll.u32 [#allocation2], 4
          %s155 = int_to_ptr.vmem [resolvable:$true] %s154
          %160 = dma.hbm_to_vmem [thread:$0]  %s2, 4096, %s155, [#allocation3], 256, 256, 16
        $region20: #{tpu_custom_call.1} parent=11 // pred_fallthru
          _
      $region12: #{tpu_custom_call.1} parent=5 // pred_fallthru
        _
      %p161 = scmp.lt.s32.totalorder %s13, 2
      // Predicated region
      $region21: #{tpu_custom_call.1} parent=5 // pred_check
        %p162 = pneg %p161
      $region22: #{tpu_custom_call.1} parent=5 // pred_check_branch
        %164 = sbr.rel (%p162) target = $region24
      $region23: #{tpu_custom_call.1} parent=5 // pred_region
        // Predicated region
        $region25: #{tpu_custom_call.1} parent=23 // pred_check
          %p165 = pneg %p71
        $region26: #{tpu_custom_call.1} parent=23 // pred_check_branch
          %167 = sbr.rel (%p165) target = $region28
        $region27: #{tpu_custom_call.1} parent=23 // pred_region
          %s168 = smul.u32 2, %s21
          %p169 = scmp.lt.s32.totalorder %s168, 3
          %s170 = scalar_select %p169, %s168, 3
          %s171 = smul.addr %s170, 8
          %s172 = scalar_lea.vmem %s1, %s171
          %s173 = smul.u32 2, %s21
        $region28: #{tpu_custom_call.1} parent=23 // pred_fallthru
          _
      $region24: #{tpu_custom_call.1} parent=5 // pred_fallthru
        _
      %p174 = scmp.le.s32.totalorder 1, %s13
      %p175 = scmp.lt.s32.totalorder %s13, 3
      %p176 = pnand %p174, %p175
      %p177 = pneg %p176
      // Predicated region
      $region29: #{tpu_custom_call.1} parent=5 // pred_check
        _
      $region30: #{tpu_custom_call.1} parent=5 // pred_check_branch
        %179 = sbr.rel (%p176) target = $region32
      $region31: #{tpu_custom_call.1} parent=5 // pred_region
        %s180 = ssub.s32 %s13, 1
        // Predicated region
        $region33: #{tpu_custom_call.1} parent=31 // pred_check
          %p181 = pneg %p98
        $region34: #{tpu_custom_call.1} parent=31 // pred_check_branch
          %183 = sbr.rel (%p181) target = $region36
        $region35: #{tpu_custom_call.1} parent=31 // pred_region
          %184 = dma.done [#allocation3], 4096
        $region36: #{tpu_custom_call.1} parent=31 // pred_fallthru
          _
        %p185 = scmp.lt.s32.totalorder %s22, 0
        %s186 = scalar_select %p185, %s22, 0
        %s187 = smul.addr %s186, 8
        %s188 = scalar_lea.vmem %s0, %s187
        %p189 = pneg %p51
        %p190 = pneg %p48
        %s191 = smul.u32 2, %s23
        %p192 = scmp.lt.s32.totalorder %s191, 3
        %s193 = scalar_select %p192, %s191, 3
        %s194 = smul.addr %s193, 8
        %s195 = scalar_lea.vmem %s1, %s194
        %p196 = pneg %p77
        %p197 = pneg %p74
        %p198 = pneg %p98
        %p199 = pneg %p95
        %p200 = pneg %p126
        %p201 = pneg %p123
        %s202 = sand.u32 %s113, 1
        %s203 = scalar_lea.sflag [#allocation4], %s202
        %s204 = sand.u32 %s113, 1
        %s205 = smul.addr %s204, 32
        %s206 = scalar_lea.vmem [#allocation5], %s205
        %p207 = scmp.lt.s32.totalorder %s22, 0
        %s208 = scalar_select %p207, %s22, 0
        %s209 = smul.addr %s208, 8
        %s210 = scalar_lea.vmem %s0, %s209
        %s211 = smul.u32 2, %s23
        %p212 = scmp.lt.s32.totalorder %s211, 3
        %s213 = scalar_select %p212, %s211, 3
        %s214 = smul.addr %s213, 8
        %s215 = scalar_lea.vmem %s1, %s214
        %s216 = smul.u32 2, %s23
        %s217 = smul.u32 2, %s23
        %s218 = smul.u32 2, %s22
        %v219 = vld [vmem:[%s210] sm:$0xff]
        %v220 = vld [vmem:[%s210 + $0x8] sm:$0xff]
        %v221 = vld [vmem:[%s215] sm:$0xff]
        %v222 = vld [vmem:[%s215 + $0x8] sm:$0xff]
        %v223 = vld [vmem:[#allocation2] sm:$0xff]
        %v224 = vld [vmem:[#allocation2 + $0x8] sm:$0xff]
        %v225 = vld [vmem:[#allocation2 + $0x10] sm:$0xff]
        %v226 = vld [vmem:[#allocation2 + $0x18] sm:$0xff]
        %v227 = vld [vmem:[#allocation2 + $0x20] sm:$0xff]
        %v228 = vld [vmem:[#allocation2 + $0x28] sm:$0xff]
        %v229 = vld [vmem:[#allocation2 + $0x30] sm:$0xff]
        %v230 = vld [vmem:[#allocation2 + $0x38] sm:$0xff]
        %v231 = vld [vmem:[#allocation2 + $0x40] sm:$0xff]
        %v232 = vld [vmem:[#allocation2 + $0x48] sm:$0xff]
        %v233 = vld [vmem:[#allocation2 + $0x50] sm:$0xff]
        %v234 = vld [vmem:[#allocation2 + $0x58] sm:$0xff]
        %v235 = vld [vmem:[#allocation2 + $0x60] sm:$0xff]
        %v236 = vld [vmem:[#allocation2 + $0x68] sm:$0xff]
        %v237 = vld [vmem:[#allocation2 + $0x70] sm:$0xff]
        %v238 = vld [vmem:[#allocation2 + $0x78] sm:$0xff]
        %v239 = vld [vmem:[#allocation2 + $0x80] sm:$0xff]
        %v240 = vld [vmem:[#allocation2 + $0x88] sm:$0xff]
        %v241 = vld [vmem:[#allocation2 + $0x90] sm:$0xff]
        %v242 = vld [vmem:[#allocation2 + $0x98] sm:$0xff]
        %v243 = vld [vmem:[#allocation2 + $0xa0] sm:$0xff]
        %v244 = vld [vmem:[#allocation2 + $0xa8] sm:$0xff]
        %v245 = vld [vmem:[#allocation2 + $0xb0] sm:$0xff]
        %v246 = vld [vmem:[#allocation2 + $0xb8] sm:$0xff]
        %v247 = vld [vmem:[#allocation2 + $0xc0] sm:$0xff]
        %v248 = vld [vmem:[#allocation2 + $0xc8] sm:$0xff]
        %v249 = vld [vmem:[#allocation2 + $0xd0] sm:$0xff]
        %v250 = vld [vmem:[#allocation2 + $0xd8] sm:$0xff]
        %v251 = vld [vmem:[#allocation2 + $0xe0] sm:$0xff]
        %v252 = vld [vmem:[#allocation2 + $0xe8] sm:$0xff]
        %v253 = vld [vmem:[#allocation2 + $0xf0] sm:$0xff]
        %v254 = vld [vmem:[#allocation2 + $0xf8] sm:$0xff]
        %vm255 = vcmask 130048
        %v257 = vsel %vm255, %v221, 0
        %v260 = vsel %vm255, %v222, 0
        %262 = vmatprep.subr.mxu0 0.0
        %263 = vmatpush1.msra.mxu0 %v219
        %264 = vmatprep.subr.mxu0 0.0
        %265 = vmatpush1.msra.mxu0 %v220
        %266 = vmatprep.subr.mxu0 0.0
        %267 = vmatpush1.msra.mxu0 0.0
        %268 = vmatprep.subr.mxu0 0.0
        %269 = vmatpush1.msra.mxu0 0.0
        %270 = vmatprep.subr.mxu0 0.0
        %271 = vmatpush1.msra.mxu0 0.0
        %272 = vmatprep.subr.mxu0 0.0
        %273 = vmatpush1.msra.mxu0 0.0
        %274 = vmatprep.subr.mxu0 0.0
        %275 = vmatpush1.msra.mxu0 0.0
        %276 = vmatprep.subr.mxu0 0.0
        %277 = vmatpush1.msra.mxu0 0.0
        %278 = vmatprep.subr.mxu0 0.0
        %279 = vmatpush1.msra.mxu0 0.0
        %280 = vmatprep.subr.mxu0 0.0
        %281 = vmatpush1.msra.mxu0 0.0
        %282 = vmatprep.subr.mxu0 0.0
        %283 = vmatpush1.msra.mxu0 0.0
        %284 = vmatprep.subr.mxu0 0.0
        %285 = vmatpush1.msra.mxu0 0.0
        %286 = vmatprep.subr.mxu0 0.0
        %287 = vmatpush1.msra.mxu0 0.0
        %288 = vmatprep.subr.mxu0 0.0
        %289 = vmatpush1.msra.mxu0 0.0
        %290 = vmatprep.subr.mxu0 0.0
        %291 = vmatpush1.msra.mxu0 0.0
        %292 = vmatprep.subr.mxu0 0.0
        %293 = vmatpush1.msra.mxu0 0.0
        %294 = vmatprep.subr.mxu0 0.0
        %295 = vmatpush1.msra.mxu0 0.0
        %296 = vmatprep.subr.mxu0 0.0
        %297 = vmatpush1.msra.mxu0 0.0
        %298 = vmatprep.subr.mxu0 0.0
        %299 = vmatpush1.msra.mxu0 0.0
        %300 = vmatprep.subr.mxu0 0.0
        %301 = vmatpush1.msra.mxu0 0.0
        %302 = vmatprep.subr.mxu0 0.0
        %303 = vmatpush1.msra.mxu0 0.0
        %304 = vmatprep.subr.mxu0 0.0
        %305 = vmatpush1.msra.mxu0 0.0
        %306 = vmatprep.subr.mxu0 0.0
        %307 = vmatpush1.msra.mxu0 0.0
        %308 = vmatprep.subr.mxu0 0.0
        %309 = vmatpush1.msra.mxu0 0.0
        %310 = vmatprep.subr.mxu0 0.0
        %311 = vmatpush1.msra.mxu0 0.0
        %312 = vmatprep.subr.mxu0 0.0
        %313 = vmatpush1.msra.mxu0 0.0
        %314 = vmatprep.subr.mxu0 0.0
        %315 = vmatpush1.msra.mxu0 0.0
        %316 = vmatprep.subr.mxu0 0.0
        %317 = vmatpush1.msra.mxu0 0.0
        %318 = vmatprep.subr.mxu0 0.0
        %319 = vmatpush1.msra.mxu0 0.0
        %320 = vmatprep.subr.mxu0 0.0
        %321 = vmatpush1.msra.mxu0 0.0
        %322 = vmatprep.subr.mxu0 0.0
        %323 = vmatpush1.msra.mxu0 0.0
        %324 = vmatprep.subr.mxu0 0.0
        %325 = vmatpush1.msra.mxu0 0.0
        %326 = vmatprep.mubr.f32.mxu0 0.0
        %327 = vmatmul.mubr.f32.gmra.mrb[0].mxu0 %v257
        %v328 = vpop.f32.mrb[0].mxu0
        %v329 = vadd.f32 0.0, %v328
        %v330 = vpop.f32.mrb[0].mxu0
        %331 = vmatprep.mubr.f32.mxu0 0.0
        %332 = vmatmul.mubr.f32.gmra.mrb[0].mxu0 %v260
        %v333 = vpop.f32.mrb[0].mxu0
        %v334 = vadd.f32 0.0, %v333
        %v335 = vpop.f32.mrb[0].mxu0
        %336 = vdwg.mxu0
        %337 = vmatprep.subr.mxu0 %v224
        %338 = vmatpush1.msra.mxu0 %v223
        %339 = vmatprep.subr.mxu0 %v226
        %340 = vmatpush1.msra.mxu0 %v225
        %341 = vmatprep.subr.mxu0 %v228
        %342 = vmatpush1.msra.mxu0 %v227
        %343 = vmatprep.subr.mxu0 %v230
        %344 = vmatpush1.msra.mxu0 %v229
        %345 = vmatprep.subr.mxu0 %v232
        %346 = vmatpush1.msra.mxu0 %v231
        %347 = vmatprep.subr.mxu0 %v234
        %348 = vmatpush1.msra.mxu0 %v233
        %349 = vmatprep.subr.mxu0 %v236
        %350 = vmatpush1.msra.mxu0 %v235
        %351 = vmatprep.subr.mxu0 %v238
        %352 = vmatpush1.msra.mxu0 %v237
        %353 = vmatprep.subr.mxu0 %v240
        %354 = vmatpush1.msra.mxu0 %v239
        %355 = vmatprep.subr.mxu0 %v242
        %356 = vmatpush1.msra.mxu0 %v241
        %357 = vmatprep.subr.mxu0 %v244
        %358 = vmatpush1.msra.mxu0 %v243
        %359 = vmatprep.subr.mxu0 %v246
        %360 = vmatpush1.msra.mxu0 %v245
        %361 = vmatprep.subr.mxu0 %v248
        %362 = vmatpush1.msra.mxu0 %v247
        %363 = vmatprep.subr.mxu0 %v250
        %364 = vmatpush1.msra.mxu0 %v249
        %365 = vmatprep.subr.mxu0 %v252
        %366 = vmatpush1.msra.mxu0 %v251
        %367 = vmatprep.subr.mxu0 %v254
        %368 = vmatpush1.msra.mxu0 %v253
        %369 = vmatprep.subr.mxu0 0.0
        %370 = vmatpush1.msra.mxu0 0.0
        %371 = vmatprep.subr.mxu0 0.0
        %372 = vmatpush1.msra.mxu0 0.0
        %373 = vmatprep.subr.mxu0 0.0
        %374 = vmatpush1.msra.mxu0 0.0
        %375 = vmatprep.subr.mxu0 0.0
        %376 = vmatpush1.msra.mxu0 0.0
        %377 = vmatprep.subr.mxu0 0.0
        %378 = vmatpush1.msra.mxu0 0.0
        %379 = vmatprep.subr.mxu0 0.0
        %380 = vmatpush1.msra.mxu0 0.0
        %381 = vmatprep.subr.mxu0 0.0
        %382 = vmatpush1.msra.mxu0 0.0
        %383 = vmatprep.subr.mxu0 0.0
        %384 = vmatpush1.msra.mxu0 0.0
        %385 = vmatprep.subr.mxu0 0.0
        %386 = vmatpush1.msra.mxu0 0.0
        %387 = vmatprep.subr.mxu0 0.0
        %388 = vmatpush1.msra.mxu0 0.0
        %389 = vmatprep.subr.mxu0 0.0
        %390 = vmatpush1.msra.mxu0 0.0
        %391 = vmatprep.subr.mxu0 0.0
        %392 = vmatpush1.msra.mxu0 0.0
        %393 = vmatprep.subr.mxu0 0.0
        %394 = vmatpush1.msra.mxu0 0.0
        %395 = vmatprep.subr.mxu0 0.0
        %396 = vmatpush1.msra.mxu0 0.0
        %397 = vmatprep.subr.mxu0 0.0
        %398 = vmatpush1.msra.mxu0 0.0
        %399 = vmatprep.subr.mxu0 0.0
        %400 = vmatpush1.msra.mxu0 0.0
        %401 = vmatprep.mubr.f32.mxu0 0.0
        %402 = vmatmul.mubr.f32.gmra.mrb[0].mxu0 %v329
        %v403 = vpop.f32.mrb[0].mxu0
        %v404 = vadd.f32 0.0, %v403
        %v405 = vpop.f32.mrb[0].mxu0
        %v406 = vadd.f32 0.0, %v405
        %407 = vmatprep.mubr.f32.mxu0 0.0
        %408 = vmatmul.mubr.f32.gmra.mrb[0].mxu0 %v334
        %v409 = vpop.f32.mrb[0].mxu0
        %v410 = vadd.f32 0.0, %v409
        %v411 = vpop.f32.mrb[0].mxu0
        %v412 = vadd.f32 0.0, %v411
        %413 = vdwg.mxu0
        %414 = vst [vmem:[%s206] sm:$0xff] %v404
        %415 = vst [vmem:[%s206 + $0x8] sm:$0xff] %v406
        %416 = vst [vmem:[%s206 + $0x10] sm:$0xff] %v410
        %417 = vst [vmem:[%s206 + $0x18] sm:$0xff] %v412
        %s418 = sand.u32 %s113, 1
        %s419 = scalar_lea.sflag [#allocation4], %s418
        %s420 = sand.u32 %s113, 1
        %s421 = smul.addr %s420, 32
        %s422 = scalar_lea.vmem [#allocation5], %s421
        // Predicated region
        $region37: #{tpu_custom_call.1} parent=31 // pred_check
          %p423 = pneg %p123
        $region38: #{tpu_custom_call.1} parent=31 // pred_check_branch
          %425 = sbr.rel (%p423) target = $region40
        $region39: #{tpu_custom_call.1} parent=31 // pred_region
          %s426 = smul.u32 2, %s23
          %s427 = smul.u32 2, %s22
          %s429 = ssub.s32 512, 512
          %430 = vsyncadd %s419, %s429
          %s431 = smul.addr %s426, 2
          %s432 = sadd.s32 %s427, %s431
          %s433 = smul.addr %s432, 128
          %s434 = scalar_lea.hbm %s3, %s433
          %s435 = sshll.u32 %s422, 4
          %s436 = int_to_ptr.vmem [resolvable:$true] %s435
          %441 = dma.vmem_to_hbm [thread:$0]  %s436, 512, %s434, %s419, 256, 256, 16
        $region40: #{tpu_custom_call.1} parent=31 // pred_fallthru
          _
      $region32: #{tpu_custom_call.1} parent=5 // pred_fallthru
        _
      %p442 = scmp.le.s32.totalorder 2, %s13
      // Predicated region
      $region41: #{tpu_custom_call.1} parent=5 // pred_check
        %p443 = pneg %p442
      $region42: #{tpu_custom_call.1} parent=5 // pred_check_branch
        %445 = sbr.rel (%p443) target = $region44
      $region43: #{tpu_custom_call.1} parent=5 // pred_region
        %s446 = ssub.s32 %s13, 2
        // Predicated region
        $region45: #{tpu_custom_call.1} parent=43 // pred_check
          %p447 = pneg %p129
        $region46: #{tpu_custom_call.1} parent=43 // pred_check_branch
          %449 = sbr.rel (%p447) target = $region48
        $region47: #{tpu_custom_call.1} parent=43 // pred_region
          %s450 = sand.u32 %s114, 1
          %s451 = scalar_lea.sflag [#allocation4], %s450
          %s452 = sand.u32 %s114, 1
          %s453 = smul.addr %s452, 32
          %s454 = scalar_lea.vmem [#allocation5], %s453
          %455 = dma.done %s451, 512
        $region48: #{tpu_custom_call.1} parent=43 // pred_fallthru
          _
      $region44: #{tpu_custom_call.1} parent=5 // pred_fallthru
        _
    $region6: #{tpu_custom_call.1} parent=1 // loop_footer
      %s17 = sadd.s32 1, %s13
    $region7: #{tpu_custom_call.1} parent=1 // loop_footer_branch
      %12 = sbr.rel target = $region3
    $region8: #{tpu_custom_call.1} parent=1 // loop_exit
      _
    %456 = vsyncpa [#allocation3], 1
    %s457 = scalar_lea.sflag [#allocation3], 1
    %458 = vsyncpa %s457, 1
    %459 = vsyncpa [#allocation4], 1
    %s460 = scalar_lea.sflag [#allocation4], 1
    %461 = vsyncpa %s460, 1

// kernel: tpu_custom_call.1
$region0: #{tpu_custom_call.1}
  #allocation0 [shape = 'u32[]', space=smem, size = 0x4, offset = 0x4, fixed_abs, tag = 'smem constant byte address 0x4 - core index']
  #allocation1 [shape = 'u32[144,128]{1,0:T(1,128)}', space=vmem, size = 0x12000, scoped, tag = 'internal scratch']
  %s0 = inlined_call_operand.vmem [shape: f32[16,128], index: 0, kind: input, shape index: {}]
  %s1 = inlined_call_operand.vmem [shape: f32[32,16], index: 1, kind: input, shape index: {}]
  %s2 = inlined_call_operand.hbm [shape: f32[128,256], index: 2, kind: input, shape index: {}]
  %s3 = inlined_call_operand.hbm [shape: f32[32,256], index: 3, kind: output, shape index: {}]
  %s4 = sld [smem:[#allocation0]]
  $region49: #{tpu_custom_call.1} parent=0
    _
  %s6 = ssub.s32 1, %s4
  %s7 = scalar_select 0, %s6, %s4
  $region1: #{tpu_custom_call.1} parent=0
    #allocation2 [shape = 'u8[131072]{0}', space=vmem, size = 0x20000, scoped, tag = 'input window, operand 2, single buffered']
    #allocation3 [shape = 's32[2]{0}', space=sflag, size = 0x8, scoped, tag = 'scoped memory for tpu_custom_call.1']
    #allocation4 [shape = 's32[2]{0}', space=sflag, size = 0x8, scoped, tag = 'scoped memory for tpu_custom_call.1']
    #allocation5 [shape = 'u8[32768]{0}', space=vmem, size = 0x8000, scoped, tag = 'output window, operand 0']
    %8 = vsyncpa [#allocation3], 0
    %9 = vsyncpa [#allocation4], 0
    %s10 = scalar_lea.sflag [#allocation4], 1
    %11 = vsyncpa %s10, 0
    loop: start=0, step=1, limit=4
    $region2: #{tpu_custom_call.1} parent=1 // loop_pre_header
      _
    $region3: #{tpu_custom_call.1} parent=1 // loop_header
      %s13 = sphi 0, %s17
      %p14 = scmp.ge.s32.totalorder %s13, 4
      %s20 = sphi 0, %s32
      %s21 = sphi 0, %s28
      %s22 = sphi 0, %s20
      %s23 = sphi 0, %s21
      %s24 = sphi 0, %s22
      %s25 = sphi 0, %s23
      %s35 = sphi 0, %s37
      %s38 = sphi 0, %s35
      %s39 = sphi 0, %s38
      %s55 = sphi 0, %s39
      %s61 = sphi 0, %s63
      %s64 = sphi 0, %s61
      %s65 = sphi 0, %s64
      %s81 = sphi 0, %s65
      %s85 = sphi 0, %s85
      %s87 = sphi 0, %s85
      %s88 = sphi 0, %s87
      %s102 = sphi 0, %s88
      %s110 = sphi 0, %s112
      %s113 = sphi 0, %s110
      %s114 = sphi 0, %s113
      %s130 = sphi 0, %s114
    $region4: #{tpu_custom_call.1} parent=1 // loop_header_branch
      %16 = sbr.rel (%p14) target = $region8
    $region5: #{tpu_custom_call.1} parent=1 // loop_body
      %s18 = ssub.s32 %s13, 1
      %s19 = ssub.s32 %s13, 2
      %s26 = sadd.s32 1, %s21
      %p27 = scmp.ge.s32.totalorder %s26, 2
      %s28 = scalar_select %p27, 0, %s26
      %s29 = sadd.s32 1, %s20
      %s30 = scalar_select %p27, %s29, %s20
      %p31 = scmp.ge.s32.totalorder %s30, 1
      %s32 = scalar_select %p31, 0, %s30
      %s33 = ssub.s32 %s20, %s32
      %p34 = scmp.eq.s32.totalorder %s33, 0
      %s36 = sadd.s32 %s35, 1
      %s37 = scalar_select %p34, %s35, %s36
      %p40 = pneg %p34
      %p41 = scmp.eq.s32.totalorder %s13, 1
      %p42 = por %p40, %p41
      %p43 = scmp.ne.s32.totalorder %s35, %s38
      %p44 = scmp.eq.s32.totalorder %s13, 0
      %p45 = por %p43, %p44
      %p46 = scmp.ne.s32.totalorder %s35, %s38
      %p47 = scmp.eq.s32.totalorder %s18, 1
      %p48 = por %p46, %p47
      %p49 = scmp.ne.s32.totalorder %s38, %s39
      %p50 = scmp.eq.s32.totalorder %s18, 0
      %p51 = por %p49, %p50
      %p52 = scmp.ne.s32.totalorder %s38, %s39
      %p53 = scmp.eq.s32.totalorder %s19, 1
      %p54 = por %p52, %p53
      %p56 = scmp.ne.s32.totalorder %s39, %s55
      %p57 = scmp.eq.s32.totalorder %s19, 0
      %p58 = por %p56, %p57
      %s59 = ssub.s32 %s21, %s28
      %p60 = scmp.eq.s32.totalorder %s59, 0
      %s62 = sadd.s32 %s61, 1
      %s63 = scalar_select %p60, %s61, %s62
      %p66 = pneg %p60
      %p67 = scmp.eq.s32.totalorder %s13, 1
      %p68 = por %p66, %p67
      %p69 = scmp.ne.s32.totalorder %s61, %s64
      %p70 = scmp.eq.s32.totalorder %s13, 0
      %p71 = por %p69, %p70
      %p72 = scmp.ne.s32.totalorder %s61, %s64
      %p73 = scmp.eq.s32.totalorder %s18, 1
      %p74 = por %p72, %p73
      %p75 = scmp.ne.s32.totalorder %s64, %s65
      %p76 = scmp.eq.s32.totalorder %s18, 0
      %p77 = por %p75, %p76
      %p78 = scmp.ne.s32.totalorder %s64, %s65
      %p79 = scmp.eq.s32.totalorder %s19, 1
      %p80 = por %p78, %p79
      %p82 = scmp.ne.s32.totalorder %s65, %s81
      %p83 = scmp.eq.s32.totalorder %s19, 0
      %p84 = por %p82, %p83
      %s86 = sadd.s32 %s85, 1
      %p89 = scmp.eq.s32.totalorder %s13, 1
      %p90 = scmp.ne.s32.totalorder %s85, %s87
      %p91 = scmp.eq.s32.totalorder %s13, 0
      %p92 = por %p90, %p91
      %p93 = scmp.ne.s32.totalorder %s85, %s87
      %p94 = scmp.eq.s32.totalorder %s18, 1
      %p95 = por %p93, %p94
      %p96 = scmp.ne.s32.totalorder %s87, %s88
      %p97 = scmp.eq.s32.totalorder %s18, 0
      %p98 = por %p96, %p97
      %p99 = scmp.ne.s32.totalorder %s87, %s88
      %p100 = scmp.eq.s32.totalorder %s19, 1
      %p101 = por %p99, %p100
      %p103 = scmp.ne.s32.totalorder %s88, %s102
      %p104 = scmp.eq.s32.totalorder %s19, 0
      %p105 = por %p103, %p104
      %s106 = ssub.s32 %s21, %s28
      %s107 = ssub.s32 %s20, %s32
      %s108 = sor.u32 %s106, %s107
      %p109 = scmp.eq.s32.totalorder %s108, 0
      %s111 = sadd.s32 %s110, 1
      %s112 = scalar_select %p109, %s110, %s111
      %p115 = pneg %p109
      %p116 = scmp.eq.s32.totalorder %s13, 1
      %p117 = por %p115, %p116
      %p118 = scmp.ne.s32.totalorder %s110, %s113
      %p119 = scmp.eq.s32.totalorder %s13, 0
      %p120 = por %p118, %p119
      %p121 = scmp.ne.s32.totalorder %s110, %s113
      %p122 = scmp.eq.s32.totalorder %s18, 1
      %p123 = por %p121, %p122
      %p124 = scmp.ne.s32.totalorder %s113, %s114
      %p125 = scmp.eq.s32.totalorder %s18, 0
      %p126 = por %p124, %p125
      %p127 = scmp.ne.s32.totalorder %s113, %s114
      %p128 = scmp.eq.s32.totalorder %s19, 1
      %p129 = por %p127, %p128
      %p131 = scmp.ne.s32.totalorder %s114, %s130
      %p132 = scmp.eq.s32.totalorder %s19, 0
      %p133 = por %p131, %p132
      %p134 = scmp.le.s32.totalorder 1, %s13
      %p135 = scmp.lt.s32.totalorder %s13, 3
      %p136 = pnand %p134, %p135
      %p137 = pneg %p136
      // Predicated region
      $region9: #{tpu_custom_call.1} parent=5 // pred_check
        _
      $region10: #{tpu_custom_call.1} parent=5 // pred_check_branch
        %139 = sbr.rel (%p136) target = $region12
      $region11: #{tpu_custom_call.1} parent=5 // pred_region
        %s140 = ssub.s32 %s13, 1
        // Predicated region
        $region13: #{tpu_custom_call.1} parent=11 // pred_check
          %p141 = pneg %p51
        $region14: #{tpu_custom_call.1} parent=11 // pred_check_branch
          %143 = sbr.rel (%p141) target = $region16
        $region15: #{tpu_custom_call.1} parent=11 // pred_region
          %p144 = scmp.lt.s32.totalorder %s22, 0
          %s145 = scalar_select %p144, %s22, 0
          %s146 = smul.addr %s145, 8
          %s147 = scalar_lea.vmem %s0, %s146
        $region16: #{tpu_custom_call.1} parent=11 // pred_fallthru
          _
        // Predicated region
        $region17: #{tpu_custom_call.1} parent=11 // pred_check
          %p148 = pneg %p98
        $region18: #{tpu_custom_call.1} parent=11 // pred_check_branch
          %150 = sbr.rel (%p148) target = $region20
        $region19: #{tpu_custom_call.1} parent=11 // pred_region
          %s152 = ssub.s32 4096, 4096
          %153 = vsyncadd [#allocation3], %s152
          %s154 = sshll.u32 [#allocation2], 4
          %s155 = int_to_ptr.vmem [resolvable:$true] %s154
          %160 = dma.hbm_to_vmem [thread:$0]  %s2, 4096, %s155, [#allocation3], 256, 256, 16
        $region20: #{tpu_custom_call.1} parent=11 // pred_fallthru
          _
      $region12: #{tpu_custom_call.1} parent=5 // pred_fallthru
        _
      %p161 = scmp.lt.s32.totalorder %s13, 2
      // Predicated region
      $region21: #{tpu_custom_call.1} parent=5 // pred_check
        %p162 = pneg %p161
      $region22: #{tpu_custom_call.1} parent=5 // pred_check_branch
        %164 = sbr.rel (%p162) target = $region24
      $region23: #{tpu_custom_call.1} parent=5 // pred_region
        // Predicated region
        $region25: #{tpu_custom_call.1} parent=23 // pred_check
          %p165 = pneg %p71
        $region26: #{tpu_custom_call.1} parent=23 // pred_check_branch
          %167 = sbr.rel (%p165) target = $region28
        $region27: #{tpu_custom_call.1} parent=23 // pred_region
          %s168 = smul.u32 2, %s21
          %p169 = scmp.lt.s32.totalorder %s168, 3
          %s170 = scalar_select %p169, %s168, 3
          %s171 = smul.addr %s170, 8
          %s172 = scalar_lea.vmem %s1, %s171
          %s173 = smul.u32 2, %s21
        $region28: #{tpu_custom_call.1} parent=23 // pred_fallthru
          _
      $region24: #{tpu_custom_call.1} parent=5 // pred_fallthru
        _
      %p174 = scmp.le.s32.totalorder 1, %s13
      %p175 = scmp.lt.s32.totalorder %s13, 3
      %p176 = pnand %p174, %p175
      %p177 = pneg %p176
      // Predicated region
      $region29: #{tpu_custom_call.1} parent=5 // pred_check
        _
      $region30: #{tpu_custom_call.1} parent=5 // pred_check_branch
        %179 = sbr.rel (%p176) target = $region32
      $region31: #{tpu_custom_call.1} parent=5 // pred_region
        %s180 = ssub.s32 %s13, 1
        // Predicated region
        $region33: #{tpu_custom_call.1} parent=31 // pred_check
          %p181 = pneg %p98
        $region34: #{tpu_custom_call.1} parent=31 // pred_check_branch
          %183 = sbr.rel (%p181) target = $region36
        $region35: #{tpu_custom_call.1} parent=31 // pred_region
          %184 = dma.done [#allocation3], 4096
        $region36: #{tpu_custom_call.1} parent=31 // pred_fallthru
          _
        %p185 = scmp.lt.s32.totalorder %s22, 0
        %s186 = scalar_select %p185, %s22, 0
        %s187 = smul.addr %s186, 8
        %s188 = scalar_lea.vmem %s0, %s187
        %p189 = pneg %p51
        %p190 = pneg %p48
        %s191 = smul.u32 2, %s23
        %p192 = scmp.lt.s32.totalorder %s191, 3
        %s193 = scalar_select %p192, %s191, 3
        %s194 = smul.addr %s193, 8
        %s195 = scalar_lea.vmem %s1, %s194
        %p196 = pneg %p77
        %p197 = pneg %p74
        %p198 = pneg %p98
        %p199 = pneg %p95
        %p200 = pneg %p126
        %p201 = pneg %p123
        %s202 = sand.u32 %s113, 1
        %s203 = scalar_lea.sflag [#allocation4], %s202
        %s204 = sand.u32 %s113, 1
        %s205 = smul.addr %s204, 32
        %s206 = scalar_lea.vmem [#allocation5], %s205
        %p207 = scmp.lt.s32.totalorder %s22, 0
        %s208 = scalar_select %p207, %s22, 0
        %s209 = smul.addr %s208, 8
        %s210 = scalar_lea.vmem %s0, %s209
        %s211 = smul.u32 2, %s23
        %p212 = scmp.lt.s32.totalorder %s211, 3
        %s213 = scalar_select %p212, %s211, 3
        %s214 = smul.addr %s213, 8
        %s215 = scalar_lea.vmem %s1, %s214
        %s216 = smul.u32 2, %s23
        %s217 = smul.u32 2, %s23
        %s218 = smul.u32 2, %s22
        %v219 = vld [vmem:[%s210] sm:$0xff]
        %v220 = vld [vmem:[%s210 + $0x8] sm:$0xff]
        %v221 = vld [vmem:[%s215] sm:$0xff]
        %v222 = vld [vmem:[%s215 + $0x8] sm:$0xff]
        %v223 = vld [vmem:[#allocation2] sm:$0xff]
        %v224 = vld [vmem:[#allocation2 + $0x8] sm:$0xff]
        %v225 = vld [vmem:[#allocation2 + $0x10] sm:$0xff]
        %v226 = vld [vmem:[#allocation2 + $0x18] sm:$0xff]
        %v227 = vld [vmem:[#allocation2 + $0x20] sm:$0xff]
        %v228 = vld [vmem:[#allocation2 + $0x28] sm:$0xff]
        %v229 = vld [vmem:[#allocation2 + $0x30] sm:$0xff]
        %v230 = vld [vmem:[#allocation2 + $0x38] sm:$0xff]
        %v231 = vld [vmem:[#allocation2 + $0x40] sm:$0xff]
        %v232 = vld [vmem:[#allocation2 + $0x48] sm:$0xff]
        %v233 = vld [vmem:[#allocation2 + $0x50] sm:$0xff]
        %v234 = vld [vmem:[#allocation2 + $0x58] sm:$0xff]
        %v235 = vld [vmem:[#allocation2 + $0x60] sm:$0xff]
        %v236 = vld [vmem:[#allocation2 + $0x68] sm:$0xff]
        %v237 = vld [vmem:[#allocation2 + $0x70] sm:$0xff]
        %v238 = vld [vmem:[#allocation2 + $0x78] sm:$0xff]
        %v239 = vld [vmem:[#allocation2 + $0x80] sm:$0xff]
        %v240 = vld [vmem:[#allocation2 + $0x88] sm:$0xff]
        %v241 = vld [vmem:[#allocation2 + $0x90] sm:$0xff]
        %v242 = vld [vmem:[#allocation2 + $0x98] sm:$0xff]
        %v243 = vld [vmem:[#allocation2 + $0xa0] sm:$0xff]
        %v244 = vld [vmem:[#allocation2 + $0xa8] sm:$0xff]
        %v245 = vld [vmem:[#allocation2 + $0xb0] sm:$0xff]
        %v246 = vld [vmem:[#allocation2 + $0xb8] sm:$0xff]
        %v247 = vld [vmem:[#allocation2 + $0xc0] sm:$0xff]
        %v248 = vld [vmem:[#allocation2 + $0xc8] sm:$0xff]
        %v249 = vld [vmem:[#allocation2 + $0xd0] sm:$0xff]
        %v250 = vld [vmem:[#allocation2 + $0xd8] sm:$0xff]
        %v251 = vld [vmem:[#allocation2 + $0xe0] sm:$0xff]
        %v252 = vld [vmem:[#allocation2 + $0xe8] sm:$0xff]
        %v253 = vld [vmem:[#allocation2 + $0xf0] sm:$0xff]
        %v254 = vld [vmem:[#allocation2 + $0xf8] sm:$0xff]
        %vm255 = vcmask 130048
        %v257 = vsel %vm255, %v221, 0
        %v260 = vsel %vm255, %v222, 0
        %262 = vmatprep.subr.mxu0 0.0
        %263 = vmatpush1.msra.mxu0 %v219
        %264 = vmatprep.subr.mxu0 0.0
        %265 = vmatpush1.msra.mxu0 %v220
        %266 = vmatprep.subr.mxu0 0.0
        %267 = vmatpush1.msra.mxu0 0.0
        %268 = vmatprep.subr.mxu0 0.0
        %269 = vmatpush1.msra.mxu0 0.0
        %270 = vmatprep.subr.mxu0 0.0
        %271 = vmatpush1.msra.mxu0 0.0
        %272 = vmatprep.subr.mxu0 0.0
        %273 = vmatpush1.msra.mxu0 0.0
        %274 = vmatprep.subr.mxu0 0.0
        %275 = vmatpush1.msra.mxu0 0.0
        %276 = vmatprep.subr.mxu0 0.0
        %277 = vmatpush1.msra.mxu0 0.0
        %278 = vmatprep.subr.mxu0 0.0
        %279 = vmatpush1.msra.mxu0 0.0
        %280 = vmatprep.subr.mxu0 0.0
        %281 = vmatpush1.msra.mxu0 0.0
        %282 = vmatprep.subr.mxu0 0.0
        %283 = vmatpush1.msra.mxu0 0.0
        %284 = vmatprep.subr.mxu0 0.0
        %285 = vmatpush1.msra.mxu0 0.0
        %286 = vmatprep.subr.mxu0 0.0
        %287 = vmatpush1.msra.mxu0 0.0
        %288 = vmatprep.subr.mxu0 0.0
        %289 = vmatpush1.msra.mxu0 0.0
        %290 = vmatprep.subr.mxu0 0.0
        %291 = vmatpush1.msra.mxu0 0.0
        %292 = vmatprep.subr.mxu0 0.0
        %293 = vmatpush1.msra.mxu0 0.0
        %294 = vmatprep.subr.mxu0 0.0
        %295 = vmatpush1.msra.mxu0 0.0
        %296 = vmatprep.subr.mxu0 0.0
        %297 = vmatpush1.msra.mxu0 0.0
        %298 = vmatprep.subr.mxu0 0.0
        %299 = vmatpush1.msra.mxu0 0.0
        %300 = vmatprep.subr.mxu0 0.0
        %301 = vmatpush1.msra.mxu0 0.0
        %302 = vmatprep.subr.mxu0 0.0
        %303 = vmatpush1.msra.mxu0 0.0
        %304 = vmatprep.subr.mxu0 0.0
        %305 = vmatpush1.msra.mxu0 0.0
        %306 = vmatprep.subr.mxu0 0.0
        %307 = vmatpush1.msra.mxu0 0.0
        %308 = vmatprep.subr.mxu0 0.0
        %309 = vmatpush1.msra.mxu0 0.0
        %310 = vmatprep.subr.mxu0 0.0
        %311 = vmatpush1.msra.mxu0 0.0
        %312 = vmatprep.subr.mxu0 0.0
        %313 = vmatpush1.msra.mxu0 0.0
        %314 = vmatprep.subr.mxu0 0.0
        %315 = vmatpush1.msra.mxu0 0.0
        %316 = vmatprep.subr.mxu0 0.0
        %317 = vmatpush1.msra.mxu0 0.0
        %318 = vmatprep.subr.mxu0 0.0
        %319 = vmatpush1.msra.mxu0 0.0
        %320 = vmatprep.subr.mxu0 0.0
        %321 = vmatpush1.msra.mxu0 0.0
        %322 = vmatprep.subr.mxu0 0.0
        %323 = vmatpush1.msra.mxu0 0.0
        %324 = vmatprep.subr.mxu0 0.0
        %325 = vmatpush1.msra.mxu0 0.0
        %326 = vmatprep.mubr.f32.mxu0 0.0
        %327 = vmatmul.mubr.f32.gmra.mrb[0].mxu0 %v257
        %v328 = vpop.f32.mrb[0].mxu0
        %v329 = vadd.f32 0.0, %v328
        %v330 = vpop.f32.mrb[0].mxu0
        %331 = vmatprep.mubr.f32.mxu0 0.0
        %332 = vmatmul.mubr.f32.gmra.mrb[0].mxu0 %v260
        %v333 = vpop.f32.mrb[0].mxu0
        %v334 = vadd.f32 0.0, %v333
        %v335 = vpop.f32.mrb[0].mxu0
        %336 = vdwg.mxu0
        %337 = vmatprep.subr.mxu0 %v224
        %338 = vmatpush1.msra.mxu0 %v223
        %339 = vmatprep.subr.mxu0 %v226
        %340 = vmatpush1.msra.mxu0 %v225
        %341 = vmatprep.subr.mxu0 %v228
        %342 = vmatpush1.msra.mxu0 %v227
        %343 = vmatprep.subr.mxu0 %v230
        %344 = vmatpush1.msra.mxu0 %v229
        %345 = vmatprep.subr.mxu0 %v232
        %346 = vmatpush1.msra.mxu0 %v231
        %347 = vmatprep.subr.mxu0 %v234
        %348 = vmatpush1.msra.mxu0 %v233
        %349 = vmatprep.subr.mxu0 %v236
        %350 = vmatpush1.msra.mxu0 %v235
        %351 = vmatprep.subr.mxu0 %v238
        %352 = vmatpush1.msra.mxu0 %v237
        %353 = vmatprep.subr.mxu0 %v240
        %354 = vmatpush1.msra.mxu0 %v239
        %355 = vmatprep.subr.mxu0 %v242
        %356 = vmatpush1.msra.mxu0 %v241
        %357 = vmatprep.subr.mxu0 %v244
        %358 = vmatpush1.msra.mxu0 %v243
        %359 = vmatprep.subr.mxu0 %v246
        %360 = vmatpush1.msra.mxu0 %v245
        %361 = vmatprep.subr.mxu0 %v248
        %362 = vmatpush1.msra.mxu0 %v247
        %363 = vmatprep.subr.mxu0 %v250
        %364 = vmatpush1.msra.mxu0 %v249
        %365 = vmatprep.subr.mxu0 %v252
        %366 = vmatpush1.msra.mxu0 %v251
        %367 = vmatprep.subr.mxu0 %v254
        %368 = vmatpush1.msra.mxu0 %v253
        %369 = vmatprep.subr.mxu0 0.0
        %370 = vmatpush1.msra.mxu0 0.0
        %371 = vmatprep.subr.mxu0 0.0
        %372 = vmatpush1.msra.mxu0 0.0
        %373 = vmatprep.subr.mxu0 0.0
        %374 = vmatpush1.msra.mxu0 0.0
        %375 = vmatprep.subr.mxu0 0.0
        %376 = vmatpush1.msra.mxu0 0.0
        %377 = vmatprep.subr.mxu0 0.0
        %378 = vmatpush1.msra.mxu0 0.0
        %379 = vmatprep.subr.mxu0 0.0
        %380 = vmatpush1.msra.mxu0 0.0
        %381 = vmatprep.subr.mxu0 0.0
        %382 = vmatpush1.msra.mxu0 0.0
        %383 = vmatprep.subr.mxu0 0.0
        %384 = vmatpush1.msra.mxu0 0.0
        %385 = vmatprep.subr.mxu0 0.0
        %386 = vmatpush1.msra.mxu0 0.0
        %387 = vmatprep.subr.mxu0 0.0
        %388 = vmatpush1.msra.mxu0 0.0
        %389 = vmatprep.subr.mxu0 0.0
        %390 = vmatpush1.msra.mxu0 0.0
        %391 = vmatprep.subr.mxu0 0.0
        %392 = vmatpush1.msra.mxu0 0.0
        %393 = vmatprep.subr.mxu0 0.0
        %394 = vmatpush1.msra.mxu0 0.0
        %395 = vmatprep.subr.mxu0 0.0
        %396 = vmatpush1.msra.mxu0 0.0
        %397 = vmatprep.subr.mxu0 0.0
        %398 = vmatpush1.msra.mxu0 0.0
        %399 = vmatprep.subr.mxu0 0.0
        %400 = vmatpush1.msra.mxu0 0.0
        %401 = vmatprep.mubr.f32.mxu0 0.0
        %402 = vmatmul.mubr.f32.gmra.mrb[0].mxu0 %v329
        %v403 = vpop.f32.mrb[0].mxu0
        %v404 = vadd.f32 0.0, %v403
        %v405 = vpop.f32.mrb[0].mxu0
        %v406 = vadd.f32 0.0, %v405
        %407 = vmatprep.mubr.f32.mxu0 0.0
        %408 = vmatmul.mubr.f32.gmra.mrb[0].mxu0 %v334
        %v409 = vpop.f32.mrb[0].mxu0
        %v410 = vadd.f32 0.0, %v409
        %v411 = vpop.f32.mrb[0].mxu0
        %v412 = vadd.f32 0.0, %v411
        %413 = vdwg.mxu0
        %414 = vst [vmem:[%s206] sm:$0xff] %v404
        %415 = vst [vmem:[%s206 + $0x8] sm:$0xff] %v406
        %416 = vst [vmem:[%s206 + $0x10] sm:$0xff] %v410
        %417 = vst [vmem:[%s206 + $0x18] sm:$0xff] %v412
        %s418 = sand.u32 %s113, 1
        %s419 = scalar_lea.sflag [#allocation4], %s418
        %s420 = sand.u32 %s113, 1
        %s421 = smul.addr %s420, 32
        %s422 = scalar_lea.vmem [#allocation5], %s421
        // Predicated region
        $region37: #{tpu_custom_call.1} parent=31 // pred_check
          %p423 = pneg %p123
        $region38: #{tpu_custom_call.1} parent=31 // pred_check_branch
          %425 = sbr.rel (%p423) target = $region40
        $region39: #{tpu_custom_call.1} parent=31 // pred_region
          %s426 = smul.u32 2, %s23
          %s427 = smul.u32 2, %s22
          %s429 = ssub.s32 512, 512
          %430 = vsyncadd %s419, %s429
          %s431 = smul.addr %s426, 2
          %s432 = sadd.s32 %s427, %s431
          %s433 = smul.addr %s432, 128
          %s434 = scalar_lea.hbm %s3, %s433
          %s435 = sshll.u32 %s422, 4
          %s436 = int_to_ptr.vmem [resolvable:$true] %s435
          %441 = dma.vmem_to_hbm [thread:$0]  %s436, 512, %s434, %s419, 256, 256, 16
        $region40: #{tpu_custom_call.1} parent=31 // pred_fallthru
          _
      $region32: #{tpu_custom_call.1} parent=5 // pred_fallthru
        _
      %p442 = scmp.le.s32.totalorder 2, %s13
      // Predicated region
      $region41: #{tpu_custom_call.1} parent=5 // pred_check
        %p443 = pneg %p442
      $region42: #{tpu_custom_call.1} parent=5 // pred_check_branch
        %445 = sbr.rel (%p443) target = $region44
      $region43: #{tpu_custom_call.1} parent=5 // pred_region
        %s446 = ssub.s32 %s13, 2
        // Predicated region
        $region45: #{tpu_custom_call.1} parent=43 // pred_check
          %p447 = pneg %p129
        $region46: #{tpu_custom_call.1} parent=43 // pred_check_branch
          %449 = sbr.rel (%p447) target = $region48
        $region47: #{tpu_custom_call.1} parent=43 // pred_region
          %s450 = sand.u32 %s114, 1
          %s451 = scalar_lea.sflag [#allocation4], %s450
          %s452 = sand.u32 %s114, 1
          %s453 = smul.addr %s452, 32
          %s454 = scalar_lea.vmem [#allocation5], %s453
          %455 = dma.done %s451, 512
        $region48: #{tpu_custom_call.1} parent=43 // pred_fallthru
          _
      $region44: #{tpu_custom_call.1} parent=5 // pred_fallthru
        _
    $region6: #{tpu_custom_call.1} parent=1 // loop_footer
      %s17 = sadd.s32 1, %s13
    $region7: #{tpu_custom_call.1} parent=1 // loop_footer_branch
      %12 = sbr.rel target = $region3
    $region8: #{tpu_custom_call.1} parent=1 // loop_exit
      _
    %456 = vsyncpa [#allocation3], 1
    %s457 = scalar_lea.sflag [#allocation3], 1
    %458 = vsyncpa %s457, 1
    %459 = vsyncpa [#allocation4], 1
    %s460 = scalar_lea.sflag [#allocation4], 1
    %461 = vsyncpa %s460, 1

</llo_original>
